<compile_context>
chip_gen: v6e
topology: v6e:2x2x1
jax: 0.10.0
libtpu: 0.0.40
codegen_flags: <defaults>
</compile_context>

<pallas_src>
import functools

import jax
import jax.numpy as jnp
from jax.experimental import pallas as pl
from jax.experimental.pallas import tpu as pltpu

LANE = 128


def _cdiv(a, b):
    return -(-a // b)


def _next_pow2(x):
    x = int(x)
    return 1 if x <= 1 else 1 << (x - 1).bit_length()


def _encoder_kernel(plane_ids_ref, x_ref, w_ref, o_ref):
    # plane_ids_ref : SMEM int32[n_tiles]  (scalar prefetch; used by index_maps)
    # x_ref : (F, tile_n)   feature-major node tile (InputNorm folded into W)
    # w_ref : (CH, F+1)     folded per-class weights; last column is the bias
    # o_ref : (CH, tile_n)  lane-dense output tile (nodes on lanes)
    del plane_ids_ref
    f = x_ref.shape[0]
    w = w_ref[...]
    x = x_ref[...]
    # K = F is tiny (4): unrolled VPU multiply-adds (rank-1 updates) instead of
    # an MXU matmul with a mostly-padded contraction dim.
    acc = w[:, f:f + 1]                         # bias column; broadcasts over lanes
    for i in range(f):                          # static unroll over features
        acc = acc + w[:, i:i + 1] * x[i:i + 1, :]
    o_ref[...] = jnp.tanh(acc).astype(o_ref.dtype)


@functools.partial(jax.jit, static_argnames=("tile_n",))
def encoder_fused(plane_of_tile, x_cat, w_aug, *, tile_n):
    """Fused all-plane encoder.

    plane_of_tile : int32[n_tiles]   plane index of each node tile (SMEM prefetch)
    x_cat         : [F, N_total]     feature-major, planes concatenated on N
    w_aug         : [P, CH, F+1]     folded weights, bias as last column
    returns       : [CH, N_total]
    """
    f, n_total = x_cat.shape
    _, ch, faug = w_aug.shape
    n_tiles = n_total // tile_n
    itemsize = jnp.dtype(x_cat.dtype).itemsize
    cost = pl.CostEstimate(
        flops=2 * ch * faug * n_total,
        transcendentals=ch * n_total,
        bytes_accessed=itemsize * (x_cat.size + w_aug.size + ch * n_total)
        + 4 * plane_of_tile.size,
    )
    return pl.pallas_call(
        _encoder_kernel,
        out_shape=jax.ShapeDtypeStruct((ch, n_total), x_cat.dtype),
        grid_spec=pltpu.PrefetchScalarGridSpec(
            num_scalar_prefetch=1,
            grid=(n_tiles,),
            in_specs=[
                # x tile: full feature dim, tile_n nodes on lanes.
                pl.BlockSpec((f, tile_n), lambda t, plane_ids: (0, t)),
                # Per-tile plane weights (tiny; only re-DMAed on plane change).
                pl.BlockSpec((None, ch, faug),
                             lambda t, plane_ids: (plane_ids[t], 0, 0)),
            ],
            out_specs=pl.BlockSpec((ch, tile_n), lambda t, plane_ids: (0, t)),
        ),
        compiler_params=pltpu.CompilerParams(
            dimension_semantics=("parallel",)),
        cost_estimate=cost,
    )(plane_of_tile, x_cat, w_aug)


class EncoderPallas:
    """Deterministically-initialized synthetic Encoder (no checkpoint load)."""

    def __init__(self, in_features, node_features, planes, classes, key,
                 tile_n=1024):
        self.planes = list(planes)
        self.num_classes = len(classes)
        self.in_features = in_features
        self.node_features = node_features
        self.ch = self.num_classes * node_features          # 40 in the demo
        self.tile_n = tile_n

        self.params = {}
        w_aug = []
        for p in self.planes:
            key, k_w, k_b, k_m, k_s = jax.random.split(key, 5)
            # Per-class Linear: weight [C, H, F], bias [C, H]
            w = jax.random.normal(
                k_w, (self.num_classes, node_features, in_features),
                dtype=jnp.float32) * 0.1
            b = jax.random.normal(
                k_b, (self.num_classes, node_features), dtype=jnp.float32) * 0.1
            # InputNorm buffers (eval mode): running mean / std per feature.
            mean = jax.random.normal(k_m, (in_features,), dtype=jnp.float32)
            std = 1.0 + jax.random.uniform(k_s, (in_features,),
                                           dtype=jnp.float32)
            istd = 1.0 / std

            # Fold eval-mode InputNorm into the stacked per-class linear:
            #   W_c @ ((x-mean)*istd) + b_c == (W_c*istd) @ x + (b_c - (W_c*istd)@mean)
            w_stack = w.reshape(self.ch, in_features)        # [CH, F], ch = c*H+h
            w_fold = w_stack * istd[None, :]
            b_fold = b.reshape(self.ch) - w_fold @ mean
            # Append the bias as one extra weight column -> single mul-add chain.
            w_aug.append(jnp.concatenate([w_fold, b_fold[:, None]], axis=1))

            self.params[p] = dict(mean=mean, std=std, w=w, b=b)

        self.w_aug = jnp.stack(w_aug)                        # [P, CH, F+1]

    def __call__(self, x):
        n_per = [int(x[p].shape[0]) for p in self.planes]
        max_n = max(n_per)
        # Nodes live on the lane axis: tile_n is a power-of-two multiple of 128,
        # bucketed so different event sizes reuse a small set of compiles.
        tile_n = max(LANE, min(self.tile_n, _next_pow2(max_n)))

        # Pad each plane only to its own tile boundary and concatenate along the
        # node (lane) axis; the scalar-prefetched per-tile plane index selects
        # the weights, so no plane is padded to the global max N.
        tiles_per = [max(1, _cdiv(n, tile_n)) for n in n_per]
        n_tiles = sum(tiles_per)
        n_tiles_pad = _next_pow2(n_tiles)                    # bound recompiles
        n_total = n_tiles_pad * tile_n

        cols, plane_ids, offsets = [], [], []
        off = 0
        for i, p in enumerate(self.planes):
            n, nt = n_per[i], tiles_per[i]
            seg = nt * tile_n
            xt = jnp.transpose(x[p].astype(jnp.float32))     # [F, n] feature-major
            cols.append(jnp.pad(xt, ((0, 0), (0, seg - n))))
            plane_ids.extend([i] * nt)
            offsets.append(off)
            off += seg
        extra = n_tiles_pad - n_tiles
        if extra:
            cols.append(jnp.zeros((self.in_features, extra * tile_n),
                                  dtype=jnp.float32))
            plane_ids.extend([0] * extra)                    # dummy bucket tiles
        x_cat = jnp.concatenate(cols, axis=1)                # [F, N_total]
        plane_of_tile = jnp.asarray(plane_ids, dtype=jnp.int32)

        out = encoder_fused(plane_of_tile, x_cat, self.w_aug,
                            tile_n=tile_n)                   # [CH, N_total]

        ret = {}
        for i, p in enumerate(self.planes):
            n = n_per[i]
            cols_p = out[:, offsets[i]:offsets[i] + n]       # [CH, n]
            ret[p] = jnp.transpose(cols_p).reshape(
                n, self.num_classes, self.node_features)
        return ret

    def reference(self, x):
        """Plain-JAX reference matching the PyTorch module's forward (eval)."""
        ret = {}
        for p in self.planes:
            prm = self.params[p]
            xn = (x[p] - prm["mean"][None, :]) / prm["std"][None, :]    # [N, F]
            h = jnp.einsum("nf,chf->nch", xn, prm["w"]) + prm["b"][None]
            ret[p] = jnp.tanh(h)
        return ret


if __name__ == "__main__":
    in_features = 4
    node_features = 8
    planes = ["u", "v", "y"]
    classes = ["MIP", "HIP", "shower", "michel", "diffuse"]   # 5 classes
    n_nodes = {"u": 33, "v": 40, "y": 27}    # ragged per-plane node counts

    key = jax.random.PRNGKey(0)
    key, k_enc = jax.random.split(key)
    enc = EncoderPallas(in_features, node_features, planes, classes, k_enc)

    x = {}
    for p in planes:
        key, kx = jax.random.split(key)
        x[p] = jax.random.normal(kx, (n_nodes[p], in_features),
                                 dtype=jnp.float32)

    out = enc(x)
    out = jax.tree_util.tree_map(jax.block_until_ready, out)

    ref = enc.reference(x)
    for p in planes:
        assert out[p].shape == (n_nodes[p], len(classes), node_features)
        assert jnp.allclose(out[p], ref[p], atol=1e-4, rtol=1e-4), p

    print("KERNEL_OK")
</pallas_src>

<mosaic_0001>
module attributes {stable_mosaic.version = 11 : i64} {
  func.func @_encoder_kernel(%arg0: i32, %arg1: memref<4xi32, #tpu.memory_space<smem>>, %arg2: memref<4x128xf32, #tpu.memory_space<vmem>>, %arg3: memref<1x40x5xf32, #tpu.memory_space<vmem>>, %arg4: memref<40x128xf32, #tpu.memory_space<vmem>>) attributes {dimension_semantics = [#tpu.dimension_semantics<parallel>], iteration_bounds = array<i64: 4>, scalar_prefetch = 1 : i64, scratch_operands = 0 : i64, tpu.core_type = #tpu.core_type<tc>, window_params = [{transform_indices = @transform_0, window_bounds = array<i64: 4, 128>}, {transform_indices = @transform_1, window_bounds = array<i64: 1, 40, 5>}, {transform_indices = @transform_2, window_bounds = array<i64: 40, 128>}]} {
    %c0 = arith.constant 0 : index
    %c0_0 = arith.constant 0 : index
    %c0_1 = arith.constant 0 : index
    %0 = vector.load %arg3[%c0, %c0_0, %c0_1] : memref<1x40x5xf32, #tpu.memory_space<vmem>>, vector<1x40x5xf32>
    %1 = vector.shape_cast %0 : vector<1x40x5xf32> to vector<40x5xf32>
    %c0_2 = arith.constant 0 : index
    %c0_3 = arith.constant 0 : index
    %2 = vector.load %arg2[%c0_2, %c0_3] : memref<4x128xf32, #tpu.memory_space<vmem>>, vector<4x128xf32>
    %3 = vector.extract_strided_slice %1 {offsets = [0, 4], sizes = [40, 1], strides = [1, 1]} : vector<40x5xf32> to vector<40x1xf32>
    %4 = vector.extract_strided_slice %1 {offsets = [0, 0], sizes = [40, 1], strides = [1, 1]} : vector<40x5xf32> to vector<40x1xf32>
    %5 = vector.extract_strided_slice %2 {offsets = [0, 0], sizes = [1, 128], strides = [1, 1]} : vector<4x128xf32> to vector<1x128xf32>
    %6 = vector.broadcast %4 : vector<40x1xf32> to vector<40x128xf32>
    %7 = vector.broadcast %5 : vector<1x128xf32> to vector<40x128xf32>
    %8 = arith.mulf %6, %7 : vector<40x128xf32>
    %9 = vector.broadcast %3 : vector<40x1xf32> to vector<40x128xf32>
    %10 = arith.addf %9, %8 : vector<40x128xf32>
    %11 = vector.extract_strided_slice %1 {offsets = [0, 1], sizes = [40, 1], strides = [1, 1]} : vector<40x5xf32> to vector<40x1xf32>
    %12 = vector.extract_strided_slice %2 {offsets = [1, 0], sizes = [1, 128], strides = [1, 1]} : vector<4x128xf32> to vector<1x128xf32>
    %13 = vector.broadcast %11 : vector<40x1xf32> to vector<40x128xf32>
    %14 = vector.broadcast %12 : vector<1x128xf32> to vector<40x128xf32>
    %15 = arith.mulf %13, %14 : vector<40x128xf32>
    %16 = arith.addf %10, %15 : vector<40x128xf32>
    %17 = vector.extract_strided_slice %1 {offsets = [0, 2], sizes = [40, 1], strides = [1, 1]} : vector<40x5xf32> to vector<40x1xf32>
    %18 = vector.extract_strided_slice %2 {offsets = [2, 0], sizes = [1, 128], strides = [1, 1]} : vector<4x128xf32> to vector<1x128xf32>
    %19 = vector.broadcast %17 : vector<40x1xf32> to vector<40x128xf32>
    %20 = vector.broadcast %18 : vector<1x128xf32> to vector<40x128xf32>
    %21 = arith.mulf %19, %20 : vector<40x128xf32>
    %22 = arith.addf %16, %21 : vector<40x128xf32>
    %23 = vector.extract_strided_slice %1 {offsets = [0, 3], sizes = [40, 1], strides = [1, 1]} : vector<40x5xf32> to vector<40x1xf32>
    %24 = vector.extract_strided_slice %2 {offsets = [3, 0], sizes = [1, 128], strides = [1, 1]} : vector<4x128xf32> to vector<1x128xf32>
    %25 = vector.broadcast %23 : vector<40x1xf32> to vector<40x128xf32>
    %26 = vector.broadcast %24 : vector<1x128xf32> to vector<40x128xf32>
    %27 = arith.mulf %25, %26 : vector<40x128xf32>
    %28 = arith.addf %22, %27 : vector<40x128xf32>
    %29 = math.tanh %28 : vector<40x128xf32>
    %c0_4 = arith.constant 0 : index
    %c0_5 = arith.constant 0 : index
    %30 = vector.load %arg4[%c0_4, %c0_5] : memref<40x128xf32, #tpu.memory_space<vmem>>, vector<40x128xf32>
    tpu.vector_store %arg4[%c0_4, %c0_5], %29 {strides = array<i32>} : memref<40x128xf32, #tpu.memory_space<vmem>>, vector<40x128xf32>,
    return
  }
  func.func @transform_0(%arg0: i32, %arg1: memref<4xi32, #tpu.memory_space<smem>>) -> (i32, i32) {
    %c0_i32 = arith.constant 0 : i32
    %c0_i32_0 = arith.constant 0 : i32
    return %c0_i32, %arg0 : i32, i32
  }
  func.func @transform_1(%arg0: i32, %arg1: memref<4xi32, #tpu.memory_space<smem>>) -> (i32, i32, i32) {
    %0 = arith.index_cast %arg0 : i32 to index
    %1 = memref.load %arg1[%0] : memref<4xi32, #tpu.memory_space<smem>>
    %c0_i32 = arith.constant 0 : i32
    %c0_i32_0 = arith.constant 0 : i32
    %c0_i32_1 = arith.constant 0 : i32
    return %1, %c0_i32, %c0_i32_0 : i32, i32, i32
  }
  func.func @transform_2(%arg0: i32, %arg1: memref<4xi32, #tpu.memory_space<smem>>) -> (i32, i32) {
    %c0_i32 = arith.constant 0 : i32
    %c0_i32_0 = arith.constant 0 : i32
    return %c0_i32, %arg0 : i32, i32
  }
}

</mosaic_0001>

<llo_original>
// kernel: encoder_fused.1
$region0: #{encoder_fused.1}
  #allocation0 [shape = 'u32[]', space=smem, size = 0x4, offset = 0x4, fixed_abs, tag = 'smem constant byte address 0x4 - core index']
  #allocation1 [shape = 'u32[144,128]{1,0:T(1,128)}', space=vmem, size = 0x12000, scoped, tag = 'internal scratch']
  #allocation2 [shape = 's32[1]{0}', space=sflag, size = 0x4, scoped, tag = 'scoped memory for encoder_fused.1']
  #allocation3 [shape = 'u8[512]{0}', space=smem, size = 0x200, scoped, tag = 'prefetched SMEM operand 0']
  %s0 = inlined_call_operand.vmem [shape: s32[4], index: 0, kind: input, shape index: {}]
  %s1 = inlined_call_operand.vmem [shape: f32[4,512], index: 1, kind: input, shape index: {}]
  %s2 = inlined_call_operand.vmem [shape: f32[3,40,5], index: 2, kind: input, shape index: {}]
  %s3 = inlined_call_operand.hbm [shape: f32[40,512], index: 3, kind: output, shape index: {}]
  %s4 = sld [smem:[#allocation0]]
  $region41: #{encoder_fused.1} parent=0
    _
  %s6 = ssub.s32 1, %s4
  %s7 = scalar_select 0, %s6, %s4
  %s8 = sshll.u32 %s0, 4
  %s9 = int_to_ptr.vmem [resolvable:$true] %s8
  %11 = dma.vmem_to_smem %s9, 16, [#allocation3], [#allocation2]
  %12 = dma.done [#allocation2], 16
  %13 = sfence
  $region1: #{encoder_fused.1} parent=0
    #allocation4 [shape = 'u8[40960]{0}', space=vmem, size = 0xa000, scoped, tag = 'output window, operand 0']
    #allocation5 [shape = 's32[2]{0}', space=sflag, size = 0x8, scoped, tag = 'scoped memory for encoder_fused.1']
    %14 = vsyncpa [#allocation5], 0
    %s15 = scalar_lea.sflag [#allocation5], 1
    %16 = vsyncpa %s15, 0
    loop: start=0, step=1, limit=6
    $region2: #{encoder_fused.1} parent=1 // loop_pre_header
      _
    $region3: #{encoder_fused.1} parent=1 // loop_header
      %s18 = sphi 0, %s22
      %p19 = scmp.ge.s32.totalorder %s18, 6
      %s28 = sphi 0, %s30
      %s31 = sphi 0, %s28
      %s32 = sphi 0, %s31
      %s48 = sphi 0, %s32
      %s56 = sphi 0, %s58
      %s59 = sphi 0, %s56
      %s60 = sphi 0, %s59
      %s76 = sphi 0, %s60
      %s82 = sphi 0, %s84
      %s85 = sphi 0, %s82
      %s86 = sphi 0, %s85
      %s102 = sphi 0, %s86
    $region4: #{encoder_fused.1} parent=1 // loop_header_branch
      %21 = sbr.rel (%p19) target = $region8
    $region5: #{encoder_fused.1} parent=1 // loop_body
      %s23 = ssub.s32 %s18, 1
      %s24 = ssub.s32 %s18, 2
      %s25 = sadd.s32 %s18, 1
      %s26 = ssub.s32 %s18, %s25
      %p27 = scmp.eq.s32.totalorder %s26, 0
      %s29 = sadd.s32 %s28, 1
      %s30 = scalar_select %p27, %s28, %s29
      %p33 = pneg %p27
      %p34 = scmp.eq.s32.totalorder %s18, 3
      %p35 = por %p33, %p34
      %p36 = scmp.ne.s32.totalorder %s28, %s31
      %p37 = scmp.eq.s32.totalorder %s18, 0
      %p38 = por %p36, %p37
      %p39 = scmp.ne.s32.totalorder %s28, %s31
      %p40 = scmp.eq.s32.totalorder %s23, 3
      %p41 = por %p39, %p40
      %p42 = scmp.ne.s32.totalorder %s31, %s32
      %p43 = scmp.eq.s32.totalorder %s23, 0
      %p44 = por %p42, %p43
      %p45 = scmp.ne.s32.totalorder %s31, %s32
      %p46 = scmp.eq.s32.totalorder %s24, 3
      %p47 = por %p45, %p46
      %p49 = scmp.ne.s32.totalorder %s32, %s48
      %p50 = scmp.eq.s32.totalorder %s24, 0
      %p51 = por %p49, %p50
      %s52 = sld [smem:[#allocation3 + %s18]]
      %s53 = sld [smem:[#allocation3 + %s25]]
      %s54 = ssub.s32 %s52, %s53
      %p55 = scmp.eq.s32.totalorder %s54, 0
      %s57 = sadd.s32 %s56, 1
      %s58 = scalar_select %p55, %s56, %s57
      %p61 = pneg %p55
      %p62 = scmp.eq.s32.totalorder %s18, 3
      %p63 = por %p61, %p62
      %p64 = scmp.ne.s32.totalorder %s56, %s59
      %p65 = scmp.eq.s32.totalorder %s18, 0
      %p66 = por %p64, %p65
      %p67 = scmp.ne.s32.totalorder %s56, %s59
      %p68 = scmp.eq.s32.totalorder %s23, 3
      %p69 = por %p67, %p68
      %p70 = scmp.ne.s32.totalorder %s59, %s60
      %p71 = scmp.eq.s32.totalorder %s23, 0
      %p72 = por %p70, %p71
      %p73 = scmp.ne.s32.totalorder %s59, %s60
      %p74 = scmp.eq.s32.totalorder %s24, 3
      %p75 = por %p73, %p74
      %p77 = scmp.ne.s32.totalorder %s60, %s76
      %p78 = scmp.eq.s32.totalorder %s24, 0
      %p79 = por %p77, %p78
      %s80 = ssub.s32 %s18, %s25
      %p81 = scmp.eq.s32.totalorder %s80, 0
      %s83 = sadd.s32 %s82, 1
      %s84 = scalar_select %p81, %s82, %s83
      %p87 = pneg %p81
      %p88 = scmp.eq.s32.totalorder %s18, 3
      %p89 = por %p87, %p88
      %p90 = scmp.ne.s32.totalorder %s82, %s85
      %p91 = scmp.eq.s32.totalorder %s18, 0
      %p92 = por %p90, %p91
      %p93 = scmp.ne.s32.totalorder %s82, %s85
      %p94 = scmp.eq.s32.totalorder %s23, 3
      %p95 = por %p93, %p94
      %p96 = scmp.ne.s32.totalorder %s85, %s86
      %p97 = scmp.eq.s32.totalorder %s23, 0
      %p98 = por %p96, %p97
      %p99 = scmp.ne.s32.totalorder %s85, %s86
      %p100 = scmp.eq.s32.totalorder %s24, 3
      %p101 = por %p99, %p100
      %p103 = scmp.ne.s32.totalorder %s86, %s102
      %p104 = scmp.eq.s32.totalorder %s24, 0
      %p105 = por %p103, %p104
      %p106 = scmp.le.s32.totalorder 1, %s18
      %p107 = scmp.lt.s32.totalorder %s18, 5
      %p108 = pnand %p106, %p107
      %p109 = pneg %p108
      // Predicated region
      $region9: #{encoder_fused.1} parent=5 // pred_check
        _
      $region10: #{encoder_fused.1} parent=5 // pred_check_branch
        %111 = sbr.rel (%p108) target = $region12
      $region11: #{encoder_fused.1} parent=5 // pred_region
        %s112 = ssub.s32 %s18, 1
      $region12: #{encoder_fused.1} parent=5 // pred_fallthru
        _
      %p113 = scmp.lt.s32.totalorder %s18, 4
      // Predicated region
      $region13: #{encoder_fused.1} parent=5 // pred_check
        %p114 = pneg %p113
      $region14: #{encoder_fused.1} parent=5 // pred_check_branch
        %116 = sbr.rel (%p114) target = $region16
      $region15: #{encoder_fused.1} parent=5 // pred_region
        // Predicated region
        $region17: #{encoder_fused.1} parent=15 // pred_check
          %p117 = pneg %p38
        $region18: #{encoder_fused.1} parent=15 // pred_check_branch
          %119 = sbr.rel (%p117) target = $region20
        $region19: #{encoder_fused.1} parent=15 // pred_region
          %p120 = scmp.lt.s32.totalorder %s18, 3
          %s121 = scalar_select %p120, %s18, 3
          %s122 = smul.addr %s121, 4
          %s123 = scalar_lea.vmem %s1, %s122
        $region20: #{encoder_fused.1} parent=15 // pred_fallthru
          _
        // Predicated region
        $region21: #{encoder_fused.1} parent=15 // pred_check
          %p124 = pneg %p66
        $region22: #{encoder_fused.1} parent=15 // pred_check_branch
          %126 = sbr.rel (%p124) target = $region24
        $region23: #{encoder_fused.1} parent=15 // pred_region
          %s127 = sld [smem:[#allocation3 + %s18]]
          %p128 = scmp.lt.s32.totalorder %s127, 2
          %s129 = scalar_select %p128, %s127, 2
          %s130 = smul.addr %s129, 5
          %s131 = smul.addr %s130, 8
          %s132 = scalar_lea.vmem %s2, %s131
          %s133 = sld [smem:[#allocation3 + %s18]]
        $region24: #{encoder_fused.1} parent=15 // pred_fallthru
          _
      $region16: #{encoder_fused.1} parent=5 // pred_fallthru
        _
      %p134 = scmp.le.s32.totalorder 1, %s18
      %p135 = scmp.lt.s32.totalorder %s18, 5
      %p136 = pnand %p134, %p135
      %p137 = pneg %p136
      // Predicated region
      $region25: #{encoder_fused.1} parent=5 // pred_check
        _
      $region26: #{encoder_fused.1} parent=5 // pred_check_branch
        %139 = sbr.rel (%p136) target = $region28
      $region27: #{encoder_fused.1} parent=5 // pred_region
        %s140 = ssub.s32 %s18, 1
        %p141 = scmp.lt.s32.totalorder %s23, 3
        %s142 = scalar_select %p141, %s23, 3
        %s143 = smul.addr %s142, 4
        %s144 = scalar_lea.vmem %s1, %s143
        %p145 = pneg %p44
        %p146 = pneg %p41
        %s147 = sld [smem:[#allocation3 + %s23]]
        %p148 = scmp.lt.s32.totalorder %s147, 2
        %s149 = scalar_select %p148, %s147, 2
        %s150 = smul.addr %s149, 5
        %s151 = smul.addr %s150, 8
        %s152 = scalar_lea.vmem %s2, %s151
        %p153 = pneg %p72
        %p154 = pneg %p69
        %p155 = pneg %p98
        %p156 = pneg %p95
        %s157 = sand.u32 %s85, 1
        %s158 = scalar_lea.sflag [#allocation5], %s157
        %s159 = sand.u32 %s85, 1
        %s160 = smul.addr %s159, 40
        %s161 = scalar_lea.vmem [#allocation4], %s160
        %p162 = scmp.lt.s32.totalorder %s23, 3
        %s163 = scalar_select %p162, %s23, 3
        %s164 = smul.addr %s163, 4
        %s165 = scalar_lea.vmem %s1, %s164
        %s166 = sld [smem:[#allocation3 + %s23]]
        %p167 = scmp.lt.s32.totalorder %s166, 2
        %s168 = scalar_select %p167, %s166, 2
        %s169 = smul.addr %s168, 5
        %s170 = smul.addr %s169, 8
        %s171 = scalar_lea.vmem %s2, %s170
        %s172 = sld [smem:[#allocation3 + %s23]]
        %v173 = vld [vmem:[%s171] sm:$0xff]
        %v174 = vld [vmem:[%s171 + $0x8] sm:$0xff]
        %v175 = vld [vmem:[%s171 + $0x10] sm:$0xff]
        %v176 = vld [vmem:[%s171 + $0x18] sm:$0xff]
        %v177 = vld [vmem:[%s171 + $0x20] sm:$0xff]
        %v178 = vld [vmem:[%s165] sm:$0xf]
        %180 = vset.pattern.permute.xlu0 0
        %181 = vperm.xlu0 %180, %v173
        %v182 = vpop.permute.xlu0 %181
        %185 = vset.pattern.permute.xlu0 0
        %186 = vperm.xlu0 %185, %v174
        %v187 = vpop.permute.xlu0 %186
        %190 = vset.pattern.permute.xlu0 0
        %191 = vperm.xlu0 %190, %v175
        %v192 = vpop.permute.xlu0 %191
        %195 = vset.pattern.permute.xlu0 0
        %196 = vperm.xlu0 %195, %v176
        %v197 = vpop.permute.xlu0 %196
        %200 = vset.pattern.permute.xlu0 0
        %201 = vperm.xlu0 %200, %v177
        %v202 = vpop.permute.xlu0 %201
        %v204 = vlaneseq
        %v205 = vshrl.u32 %v204, 7
        %v206 = vsub.s32 0, %v205
        %v207 = vrot.slane %v178, %v206
        %v208 = vmul.f32 %v182, %v207
        %v209 = vmul.f32 %v187, %v207
        %v210 = vmul.f32 %v192, %v207
        %v211 = vmul.f32 %v197, %v207
        %v212 = vmul.f32 %v202, %v207
        %213 = vset.pattern.permute.xlu0 4
        %214 = vperm.xlu0 %213, %v173
        %v215 = vpop.permute.xlu0 %214
        %217 = vset.pattern.permute.xlu0 4
        %218 = vperm.xlu0 %217, %v174
        %v219 = vpop.permute.xlu0 %218
        %221 = vset.pattern.permute.xlu0 4
        %222 = vperm.xlu0 %221, %v175
        %v223 = vpop.permute.xlu0 %222
        %225 = vset.pattern.permute.xlu0 4
        %226 = vperm.xlu0 %225, %v176
        %v227 = vpop.permute.xlu0 %226
        %229 = vset.pattern.permute.xlu0 4
        %230 = vperm.xlu0 %229, %v177
        %v231 = vpop.permute.xlu0 %230
        %v233 = vadd.f32 %v215, %v208
        %v234 = vadd.f32 %v219, %v209
        %v235 = vadd.f32 %v223, %v210
        %v236 = vadd.f32 %v227, %v211
        %v237 = vadd.f32 %v231, %v212
        %238 = vset.pattern.permute.xlu0 1
        %239 = vperm.xlu0 %238, %v173
        %v240 = vpop.permute.xlu0 %239
        %242 = vset.pattern.permute.xlu0 1
        %243 = vperm.xlu0 %242, %v174
        %v244 = vpop.permute.xlu0 %243
        %246 = vset.pattern.permute.xlu0 1
        %247 = vperm.xlu0 %246, %v175
        %v248 = vpop.permute.xlu0 %247
        %250 = vset.pattern.permute.xlu0 1
        %251 = vperm.xlu0 %250, %v176
        %v252 = vpop.permute.xlu0 %251
        %254 = vset.pattern.permute.xlu0 1
        %255 = vperm.xlu0 %254, %v177
        %v256 = vpop.permute.xlu0 %255
        %v258 = vlaneseq
        %v259 = vshrl.u32 %v258, 7
        %v260 = vsub.s32 1, %v259
        %v261 = vrot.slane %v178, %v260
        %v262 = vmul.f32 %v240, %v261
        %v263 = vmul.f32 %v244, %v261
        %v264 = vmul.f32 %v248, %v261
        %v265 = vmul.f32 %v252, %v261
        %v266 = vmul.f32 %v256, %v261
        %v267 = vadd.f32 %v233, %v262
        %v268 = vadd.f32 %v234, %v263
        %v269 = vadd.f32 %v235, %v264
        %v270 = vadd.f32 %v236, %v265
        %v271 = vadd.f32 %v237, %v266
        %272 = vset.pattern.permute.xlu0 2
        %273 = vperm.xlu0 %272, %v173
        %v274 = vpop.permute.xlu0 %273
        %276 = vset.pattern.permute.xlu0 2
        %277 = vperm.xlu0 %276, %v174
        %v278 = vpop.permute.xlu0 %277
        %280 = vset.pattern.permute.xlu0 2
        %281 = vperm.xlu0 %280, %v175
        %v282 = vpop.permute.xlu0 %281
        %284 = vset.pattern.permute.xlu0 2
        %285 = vperm.xlu0 %284, %v176
        %v286 = vpop.permute.xlu0 %285
        %288 = vset.pattern.permute.xlu0 2
        %289 = vperm.xlu0 %288, %v177
        %v290 = vpop.permute.xlu0 %289
        %v292 = vlaneseq
        %v293 = vshrl.u32 %v292, 7
        %v294 = vsub.s32 2, %v293
        %v295 = vrot.slane %v178, %v294
        %v296 = vmul.f32 %v274, %v295
        %v297 = vmul.f32 %v278, %v295
        %v298 = vmul.f32 %v282, %v295
        %v299 = vmul.f32 %v286, %v295
        %v300 = vmul.f32 %v290, %v295
        %v301 = vadd.f32 %v267, %v296
        %v302 = vadd.f32 %v268, %v297
        %v303 = vadd.f32 %v269, %v298
        %v304 = vadd.f32 %v270, %v299
        %v305 = vadd.f32 %v271, %v300
        %306 = vset.pattern.permute.xlu0 3
        %307 = vperm.xlu0 %306, %v173
        %v308 = vpop.permute.xlu0 %307
        %310 = vset.pattern.permute.xlu0 3
        %311 = vperm.xlu0 %310, %v174
        %v312 = vpop.permute.xlu0 %311
        %314 = vset.pattern.permute.xlu0 3
        %315 = vperm.xlu0 %314, %v175
        %v316 = vpop.permute.xlu0 %315
        %318 = vset.pattern.permute.xlu0 3
        %319 = vperm.xlu0 %318, %v176
        %v320 = vpop.permute.xlu0 %319
        %322 = vset.pattern.permute.xlu0 3
        %323 = vperm.xlu0 %322, %v177
        %v324 = vpop.permute.xlu0 %323
        %v326 = vlaneseq
        %v327 = vshrl.u32 %v326, 7
        %v328 = vsub.s32 3, %v327
        %v329 = vrot.slane %v178, %v328
        %v330 = vmul.f32 %v308, %v329
        %v331 = vmul.f32 %v312, %v329
        %v332 = vmul.f32 %v316, %v329
        %v333 = vmul.f32 %v320, %v329
        %v334 = vmul.f32 %v324, %v329
        %v335 = vadd.f32 %v301, %v330
        %v336 = vadd.f32 %v302, %v331
        %v337 = vadd.f32 %v303, %v332
        %v338 = vadd.f32 %v304, %v333
        %v339 = vadd.f32 %v305, %v334
        %v340 = vtanh.pop %v335
        %v341 = vtanh.pop %v336
        %v342 = vtanh.pop %v337
        %v343 = vtanh.pop %v338
        %v344 = vtanh.pop %v339
        %345 = vst [vmem:[%s161] sm:$0xff] %v340
        %346 = vst [vmem:[%s161 + $0x8] sm:$0xff] %v341
        %347 = vst [vmem:[%s161 + $0x10] sm:$0xff] %v342
        %348 = vst [vmem:[%s161 + $0x18] sm:$0xff] %v343
        %349 = vst [vmem:[%s161 + $0x20] sm:$0xff] %v344
        %s350 = sand.u32 %s85, 1
        %s351 = scalar_lea.sflag [#allocation5], %s350
        %s352 = sand.u32 %s85, 1
        %s353 = smul.addr %s352, 40
        %s354 = scalar_lea.vmem [#allocation4], %s353
        // Predicated region
        $region29: #{encoder_fused.1} parent=27 // pred_check
          %p355 = pneg %p95
        $region30: #{encoder_fused.1} parent=27 // pred_check_branch
          %357 = sbr.rel (%p355) target = $region32
        $region31: #{encoder_fused.1} parent=27 // pred_region
          %s359 = ssub.s32 640, 640
          %360 = vsyncadd %s351, %s359
          %s361 = smul.addr %s23, 128
          %s362 = scalar_lea.hbm %s3, %s361
          %s363 = sshll.u32 %s354, 4
          %s364 = int_to_ptr.vmem [resolvable:$true] %s363
          %369 = dma.vmem_to_hbm [thread:$0]  %s364, 640, %s362, %s351, 128, 512, 8
        $region32: #{encoder_fused.1} parent=27 // pred_fallthru
          _
      $region28: #{encoder_fused.1} parent=5 // pred_fallthru
        _
      %p370 = scmp.le.s32.totalorder 2, %s18
      // Predicated region
      $region33: #{encoder_fused.1} parent=5 // pred_check
        %p371 = pneg %p370
      $region34: #{encoder_fused.1} parent=5 // pred_check_branch
        %373 = sbr.rel (%p371) target = $region36
      $region35: #{encoder_fused.1} parent=5 // pred_region
        %s374 = ssub.s32 %s18, 2
        // Predicated region
        $region37: #{encoder_fused.1} parent=35 // pred_check
          %p375 = pneg %p101
        $region38: #{encoder_fused.1} parent=35 // pred_check_branch
          %377 = sbr.rel (%p375) target = $region40
        $region39: #{encoder_fused.1} parent=35 // pred_region
          %s378 = sand.u32 %s86, 1
          %s379 = scalar_lea.sflag [#allocation5], %s378
          %s380 = sand.u32 %s86, 1
          %s381 = smul.addr %s380, 40
          %s382 = scalar_lea.vmem [#allocation4], %s381
          %383 = dma.done %s379, 640
        $region40: #{encoder_fused.1} parent=35 // pred_fallthru
          _
      $region36: #{encoder_fused.1} parent=5 // pred_fallthru
        _
    $region6: #{encoder_fused.1} parent=1 // loop_footer
      %s22 = sadd.s32 1, %s18
    $region7: #{encoder_fused.1} parent=1 // loop_footer_branch
      %17 = sbr.rel target = $region3
    $region8: #{encoder_fused.1} parent=1 // loop_exit
      _
    %384 = vsyncpa [#allocation5], 1
    %s385 = scalar_lea.sflag [#allocation5], 1
    %386 = vsyncpa %s385, 1

</llo_original>
